<compile_context>
chip_gen: v7x
topology: tpu7x:2x2x1
jax: 0.10.0
libtpu: 0.0.40
codegen_flags: <defaults>
</compile_context>

<pallas_src>
import jax
import jax.numpy as jnp
from jax.experimental import pallas as pl
from jax.experimental.pallas import tpu as pltpu


def gmm_kernel(x_ref, fcat_ref, lin_ref, sel_ref, bias_ref, z_ref):
    x = x_ref[...]                                                           # (TB, D)
    # One lane-dense MXU pass: block k of u holds x @ F_k.
    u = jnp.dot(x, fcat_ref[...], preferred_element_type=jnp.float32)       # (TB, K*D)
    # quad[b, k] = ||x_b F_k||^2 = x_b C_k x_b^T  via block-diagonal ones selector.
    quad = jnp.dot(u * u, sel_ref[...], preferred_element_type=jnp.float32)  # (TB, K)
    # Linear term x . (C_k mu_k).
    xl = jnp.dot(x, lin_ref[...], preferred_element_type=jnp.float32)        # (TB, K)
    # z_k = -0.5 * q_k + log(det_k * w_k)
    z_ref[...] = -0.5 * quad + xl + bias_ref[...]


def gmm_forward(x, weight_logits, means, inv_cov_factor, *, block_b=512):
    B, D = x.shape
    K = weight_logits.shape[0]
    f32 = jnp.float32

    # ---- parameter glue (pure JAX; parameter-only, independent of the batch) ----
    F = inv_cov_factor.astype(f32)                               # (K, D, D)
    inv_cov = jnp.einsum('kde,kfe->kdf', F, F)                   # C_k = F_k F_k^T   (K, D, D)
    # TODO(synk): determinant has no Pallas primitive; det(C_k) = det(F_k)^2 via slogdet (glue).
    logdet = 2.0 * jnp.linalg.slogdet(F)[1]                      # log det(F_k F_k^T)  (K,)
    logw = jax.nn.log_softmax(weight_logits.astype(f32), axis=0)                     # (K,)
    mu = means.astype(f32)                                       # (K, D)

    f_cat = jnp.transpose(F, (1, 0, 2)).reshape(D, K * D)        # F_k side by side   (D, K*D)
    lin = jnp.einsum('kde,ke->dk', inv_cov, mu)                  # columns C_k mu_k   (D, K)
    const = jnp.einsum('kd,kde,ke->k', mu, inv_cov, mu)          # mu_k^T C_k mu_k    (K,)
    bias = (logdet + logw - 0.5 * const).reshape(1, K)           #                    (1, K)
    sel = jnp.repeat(jnp.eye(K, dtype=f32), D, axis=0)           # block-diag ones    (K*D, K)

    # ---- batch tiling: sublane-aligned tile, padded batch, "parallel" grid axis ----
    tb = min(block_b, ((B + 7) // 8) * 8)
    b_pad = ((B + tb - 1) // tb) * tb
    xp = x.astype(f32)
    if b_pad != B:
        xp = jnp.pad(xp, ((0, b_pad - B), (0, 0)))
    num_tiles = b_pad // tb

    z = pl.pallas_call(
        gmm_kernel,
        out_shape=jax.ShapeDtypeStruct((b_pad, K), f32),
        grid_spec=pltpu.PrefetchScalarGridSpec(
            num_scalar_prefetch=0,
            grid=(num_tiles,),
            in_specs=[
                pl.BlockSpec((tb, D), lambda i: (i, 0)),          # x batch tile
                pl.BlockSpec((D, K * D), lambda i: (0, 0)),       # concatenated F_k
                pl.BlockSpec((D, K), lambda i: (0, 0)),           # C_k mu_k
                pl.BlockSpec((K * D, K), lambda i: (0, 0)),       # selector
                pl.BlockSpec((1, K), lambda i: (0, 0)),           # per-component bias
            ],
            out_specs=pl.BlockSpec((tb, K), lambda i: (i, 0)),
        ),
        compiler_params=pltpu.CompilerParams(
            dimension_semantics=("parallel",)),
    )(xp, f_cat, lin, sel, bias)

    # Tiny final reduction over the K mixture components + negation, done lane-dense
    # in the wrapper.  Equals -log(sum_k exp(-0.5 q_k) det_k w_k) but underflow-robust.
    return -jax.nn.logsumexp(z[:B], axis=-1)


if __name__ == "__main__":
    key = jax.random.PRNGKey(0)
    B, K, D = 8, 4, 16
    k1, k2, k3 = jax.random.split(key, 3)

    # deterministic parameters mirroring GMMModel.__init__(n_components=K, dim=D)
    weight_logits = jnp.zeros((K,), jnp.float32)                  # torch.zeros(K)
    means = jax.random.normal(k1, (K, D), jnp.float32)            # torch.randn(K, D)
    inv_cov_factor = jax.random.normal(k2, (K, D, D), jnp.float32) / 10.0

    x = jax.random.normal(k3, (B, D), jnp.float32)

    out = gmm_forward(x, weight_logits, means, inv_cov_factor)
    jax.block_until_ready(out)

    # Pure-JAX reference mirroring the PyTorch forward.  det(F F^T) is evaluated as
    # det(F)^2 (exact identity) so the f32 reference determinant stays well
    # conditioned; the rest follows the torch einsum structure exactly.
    inv_cov = jnp.einsum('kde,kfe->kdf', inv_cov_factor, inv_cov_factor)
    det = jnp.linalg.det(inv_cov_factor) ** 2
    w = jax.nn.softmax(weight_logits, axis=0)
    tm = x[:, None, :] - means[None, :, :]
    q = jnp.einsum('bke,bke->bk', jnp.einsum('bkd,kde->bke', tm, inv_cov), tm)
    lik = (jnp.exp(-0.5 * q) * det[None, :] * w[None, :]).sum(-1)
    ref = -jnp.log(lik)

    assert out.shape == (B,)
    # 1e-3 tolerance: the kernel uses the expanded ||x F_k||^2 form while the reference
    # uses the centered (x-mu) C (x-mu)^T contraction; f32 MXU rounding / contraction
    # order differ slightly on outputs of magnitude ~50.
    assert jnp.allclose(out, ref, rtol=1e-3, atol=1e-3), (out, ref)
    print("KERNEL_OK")
</pallas_src>

<mosaic_0001>
module attributes {stable_mosaic.version = 11 : i64} {
  func.func @gmm_kernel(%arg0: i32, %arg1: memref<8x16xf32, #tpu.memory_space<vmem>>, %arg2: memref<16x64xf32, #tpu.memory_space<vmem>>, %arg3: memref<16x4xf32, #tpu.memory_space<vmem>>, %arg4: memref<64x4xf32, #tpu.memory_space<vmem>>, %arg5: memref<1x4xf32, #tpu.memory_space<vmem>>, %arg6: memref<8x4xf32, #tpu.memory_space<vmem>>) attributes {dimension_semantics = [#tpu.dimension_semantics<parallel>], iteration_bounds = array<i64: 1>, scalar_prefetch = 0 : i64, scratch_operands = 0 : i64, tpu.core_type = #tpu.core_type<tc>, window_params = [{transform_indices = @transform_0, window_bounds = array<i64: 8, 16>}, {pipeline_mode = #tpu.pipeline_mode<synchronous>, transform_indices = @transform_1, window_bounds = array<i64: 16, 64>}, {pipeline_mode = #tpu.pipeline_mode<synchronous>, transform_indices = @transform_2, window_bounds = array<i64: 16, 4>}, {pipeline_mode = #tpu.pipeline_mode<synchronous>, transform_indices = @transform_3, window_bounds = array<i64: 64, 4>}, {pipeline_mode = #tpu.pipeline_mode<synchronous>, transform_indices = @transform_4, window_bounds = array<i64: 1, 4>}, {transform_indices = @transform_5, window_bounds = array<i64: 8, 4>}]} {
    %c0 = arith.constant 0 : index
    %c0_0 = arith.constant 0 : index
    %0 = vector.load %arg1[%c0, %c0_0] : memref<8x16xf32, #tpu.memory_space<vmem>>, vector<8x16xf32>
    %c0_1 = arith.constant 0 : index
    %c0_2 = arith.constant 0 : index
    %1 = vector.load %arg2[%c0_1, %c0_2] : memref<16x64xf32, #tpu.memory_space<vmem>>, vector<16x64xf32>
    %cst = arith.constant dense<0.000000e+00> : vector<8x64xf32>
    %2 = tpu.matmul %0, %1, %cst {dimension_numbers = #tpu.dot_dimension_numbers<[1], [0], [0], [1], [0, 0, 1, 1], [], []>} : vector<8x16xf32>, vector<16x64xf32>, vector<8x64xf32> -> vector<8x64xf32>
    %3 = arith.mulf %2, %2 : vector<8x64xf32>
    %c0_3 = arith.constant 0 : index
    %c0_4 = arith.constant 0 : index
    %4 = vector.load %arg4[%c0_3, %c0_4] : memref<64x4xf32, #tpu.memory_space<vmem>>, vector<64x4xf32>
    %cst_5 = arith.constant dense<0.000000e+00> : vector<8x4xf32>
    %5 = tpu.matmul %3, %4, %cst_5 {dimension_numbers = #tpu.dot_dimension_numbers<[1], [0], [0], [1], [0, 0, 1, 1], [], []>} : vector<8x64xf32>, vector<64x4xf32>, vector<8x4xf32> -> vector<8x4xf32>
    %c0_6 = arith.constant 0 : index
    %c0_7 = arith.constant 0 : index
    %6 = vector.load %arg3[%c0_6, %c0_7] : memref<16x4xf32, #tpu.memory_space<vmem>>, vector<16x4xf32>
    %cst_8 = arith.constant dense<0.000000e+00> : vector<8x4xf32>
    %7 = tpu.matmul %0, %6, %cst_8 {dimension_numbers = #tpu.dot_dimension_numbers<[1], [0], [0], [1], [0, 0, 1, 1], [], []>} : vector<8x16xf32>, vector<16x4xf32>, vector<8x4xf32> -> vector<8x4xf32>
    %cst_9 = arith.constant -5.000000e-01 : f32
    %8 = vector.broadcast %cst_9 : f32 to vector<8x4xf32>
    %9 = arith.mulf %8, %5 : vector<8x4xf32>
    %10 = arith.addf %9, %7 : vector<8x4xf32>
    %c0_10 = arith.constant 0 : index
    %c0_11 = arith.constant 0 : index
    %11 = vector.load %arg5[%c0_10, %c0_11] : memref<1x4xf32, #tpu.memory_space<vmem>>, vector<1x4xf32>
    %12 = vector.broadcast %11 : vector<1x4xf32> to vector<8x4xf32>
    %13 = arith.addf %10, %12 : vector<8x4xf32>
    %c0_12 = arith.constant 0 : index
    %c0_13 = arith.constant 0 : index
    %14 = vector.load %arg6[%c0_12, %c0_13] : memref<8x4xf32, #tpu.memory_space<vmem>>, vector<8x4xf32>
    tpu.vector_store %arg6[%c0_12, %c0_13], %13 {strides = array<i32>} : memref<8x4xf32, #tpu.memory_space<vmem>>, vector<8x4xf32>,
    return
  }
  func.func @transform_0(%arg0: i32) -> (i32, i32) {
    %c0_i32 = arith.constant 0 : i32
    %c0_i32_0 = arith.constant 0 : i32
    return %arg0, %c0_i32 : i32, i32
  }
  func.func @transform_1(%arg0: i32) -> (i32, i32) {
    %c0_i32 = arith.constant 0 : i32
    %c0_i32_0 = arith.constant 0 : i32
    %c0_i32_1 = arith.constant 0 : i32
    return %c0_i32, %c0_i32_0 : i32, i32
  }
  func.func @transform_2(%arg0: i32) -> (i32, i32) {
    %c0_i32 = arith.constant 0 : i32
    %c0_i32_0 = arith.constant 0 : i32
    %c0_i32_1 = arith.constant 0 : i32
    return %c0_i32, %c0_i32_0 : i32, i32
  }
  func.func @transform_3(%arg0: i32) -> (i32, i32) {
    %c0_i32 = arith.constant 0 : i32
    %c0_i32_0 = arith.constant 0 : i32
    %c0_i32_1 = arith.constant 0 : i32
    return %c0_i32, %c0_i32_0 : i32, i32
  }
  func.func @transform_4(%arg0: i32) -> (i32, i32) {
    %c0_i32 = arith.constant 0 : i32
    %c0_i32_0 = arith.constant 0 : i32
    %c0_i32_1 = arith.constant 0 : i32
    return %c0_i32, %c0_i32_0 : i32, i32
  }
  func.func @transform_5(%arg0: i32) -> (i32, i32) {
    %c0_i32 = arith.constant 0 : i32
    %c0_i32_0 = arith.constant 0 : i32
    return %arg0, %c0_i32 : i32, i32
  }
}

</mosaic_0001>

<llo_original>
// kernel: tpu_custom_call.1
$region0: #{tpu_custom_call.1}
  #allocation0 [shape = 'u32[]', space=smem, size = 0x4, offset = 0x4, fixed_abs, tag = 'smem constant byte address 0x4 - core index']
  #allocation1 [shape = 'u32[144,128]{1,0:T(1,128)}', space=vmem, size = 0x12000, scoped, tag = 'internal scratch']
  %s0 = inlined_call_operand.vmem [shape: f32[8,16], index: 0, kind: input, shape index: {}]
  %s1 = inlined_call_operand.vmem [shape: f32[16,64], index: 1, kind: input, shape index: {}]
  %s2 = inlined_call_operand.vmem [shape: f32[16,4], index: 2, kind: input, shape index: {}]
  %s3 = inlined_call_operand.vmem [shape: f32[64,4], index: 3, kind: input, shape index: {}]
  %s4 = inlined_call_operand.vmem [shape: f32[1,4], index: 4, kind: input, shape index: {}]
  %s5 = inlined_call_operand.vmem [shape: f32[8,4], index: 5, kind: output, shape index: {}]
  %s6 = sld [smem:[#allocation0]]
  $region30: #{tpu_custom_call.1} parent=0
    _
  %s8 = ssub.s32 1, %s6
  %s9 = scalar_select 0, %s8, %s6
  // Predicated region
  $region2: #{tpu_custom_call.1} parent=0 // pred_check
    _
  $region3: #{tpu_custom_call.1} parent=0 // pred_check_branch
    %11 = sbr.rel (0) target = $region5
  $region4: #{tpu_custom_call.1} parent=0 // pred_region
    _
  $region5: #{tpu_custom_call.1} parent=0 // pred_fallthru
    _
  // Predicated region
  $region6: #{tpu_custom_call.1} parent=0 // pred_check
    _
  $region7: #{tpu_custom_call.1} parent=0 // pred_check_branch
    %13 = sbr.rel (0) target = $region9
  $region8: #{tpu_custom_call.1} parent=0 // pred_region
    _
  $region9: #{tpu_custom_call.1} parent=0 // pred_fallthru
    _
  // Predicated region
  $region10: #{tpu_custom_call.1} parent=0 // pred_check
    _
  $region11: #{tpu_custom_call.1} parent=0 // pred_check_branch
    %15 = sbr.rel (0) target = $region13
  $region12: #{tpu_custom_call.1} parent=0 // pred_region
    _
  $region13: #{tpu_custom_call.1} parent=0 // pred_fallthru
    _
  // Predicated region
  $region14: #{tpu_custom_call.1} parent=0 // pred_check
    _
  $region15: #{tpu_custom_call.1} parent=0 // pred_check_branch
    %17 = sbr.rel (0) target = $region17
  $region16: #{tpu_custom_call.1} parent=0 // pred_region
    _
  $region17: #{tpu_custom_call.1} parent=0 // pred_fallthru
    _
  // Predicated region
  $region18: #{tpu_custom_call.1} parent=0 // pred_check
    _
  $region19: #{tpu_custom_call.1} parent=0 // pred_check_branch
    %19 = sbr.rel (0) target = $region21
  $region20: #{tpu_custom_call.1} parent=0 // pred_region
    _
  $region21: #{tpu_custom_call.1} parent=0 // pred_fallthru
    _
  %v20 = vld [vmem:[%s0] sm:$0xff]
  %v21 = vld [vmem:[%s1] sm:$0xff]
  %v22 = vld [vmem:[%s1 + $0x8] sm:$0xff]
  %vm23 = vcmask 130048
  %v25 = vsel %vm23, %v20, 0
  %27 = vmatprep.subr.mxu0 0.0
  %28 = vmatpush1.msra.mxu0 %v21
  %29 = vmatprep.subr.mxu0 0.0
  %30 = vmatpush1.msra.mxu0 %v22
  %31 = vmatprep.subr.mxu0 0.0
  %32 = vmatpush1.msra.mxu0 0.0
  %33 = vmatprep.subr.mxu0 0.0
  %34 = vmatpush1.msra.mxu0 0.0
  %35 = vmatprep.subr.mxu0 0.0
  %36 = vmatpush1.msra.mxu0 0.0
  %37 = vmatprep.subr.mxu0 0.0
  %38 = vmatpush1.msra.mxu0 0.0
  %39 = vmatprep.subr.mxu0 0.0
  %40 = vmatpush1.msra.mxu0 0.0
  %41 = vmatprep.subr.mxu0 0.0
  %42 = vmatpush1.msra.mxu0 0.0
  %43 = vmatprep.subr.mxu0 0.0
  %44 = vmatpush1.msra.mxu0 0.0
  %45 = vmatprep.subr.mxu0 0.0
  %46 = vmatpush1.msra.mxu0 0.0
  %47 = vmatprep.subr.mxu0 0.0
  %48 = vmatpush1.msra.mxu0 0.0
  %49 = vmatprep.subr.mxu0 0.0
  %50 = vmatpush1.msra.mxu0 0.0
  %51 = vmatprep.subr.mxu0 0.0
  %52 = vmatpush1.msra.mxu0 0.0
  %53 = vmatprep.subr.mxu0 0.0
  %54 = vmatpush1.msra.mxu0 0.0
  %55 = vmatprep.subr.mxu0 0.0
  %56 = vmatpush1.msra.mxu0 0.0
  %57 = vmatprep.subr.mxu0 0.0
  %58 = vmatpush1.msra.mxu0 0.0
  %59 = vmatprep.subr.mxu0 0.0
  %60 = vmatpush1.msra.mxu0 0.0
  %61 = vmatprep.subr.mxu0 0.0
  %62 = vmatpush1.msra.mxu0 0.0
  %63 = vmatprep.subr.mxu0 0.0
  %64 = vmatpush1.msra.mxu0 0.0
  %65 = vmatprep.subr.mxu0 0.0
  %66 = vmatpush1.msra.mxu0 0.0
  %67 = vmatprep.subr.mxu0 0.0
  %68 = vmatpush1.msra.mxu0 0.0
  %69 = vmatprep.subr.mxu0 0.0
  %70 = vmatpush1.msra.mxu0 0.0
  %71 = vmatprep.subr.mxu0 0.0
  %72 = vmatpush1.msra.mxu0 0.0
  %73 = vmatprep.subr.mxu0 0.0
  %74 = vmatpush1.msra.mxu0 0.0
  %75 = vmatprep.subr.mxu0 0.0
  %76 = vmatpush1.msra.mxu0 0.0
  %77 = vmatprep.subr.mxu0 0.0
  %78 = vmatpush1.msra.mxu0 0.0
  %79 = vmatprep.subr.mxu0 0.0
  %80 = vmatpush1.msra.mxu0 0.0
  %81 = vmatprep.subr.mxu0 0.0
  %82 = vmatpush1.msra.mxu0 0.0
  %83 = vmatprep.subr.mxu0 0.0
  %84 = vmatpush1.msra.mxu0 0.0
  %85 = vmatprep.subr.mxu0 0.0
  %86 = vmatpush1.msra.mxu0 0.0
  %87 = vmatprep.subr.mxu0 0.0
  %88 = vmatpush1.msra.mxu0 0.0
  %89 = vmatprep.subr.mxu0 0.0
  %90 = vmatpush1.msra.mxu0 0.0
  %91 = vmatprep.mubr.f32.mxu0 0.0
  %92 = vmatmul.mubr.f32.gmra.mrb[0].mxu0 %v25
  %v93 = vpop.f32.mrb[0].mxu0
  %v94 = vadd.f32 0.0, %v93
  %v95 = vpop.f32.mrb[0].mxu0
  %96 = vdwg.mxu0
  %v97 = vmul.f32 %v94, %v94
  %v98 = vld [vmem:[%s3] sm:$0xff]
  %v99 = vld [vmem:[%s3 + $0x8] sm:$0xff]
  %v100 = vld [vmem:[%s3 + $0x10] sm:$0xff]
  %v101 = vld [vmem:[%s3 + $0x18] sm:$0xff]
  %v102 = vld [vmem:[%s3 + $0x20] sm:$0xff]
  %v103 = vld [vmem:[%s3 + $0x28] sm:$0xff]
  %v104 = vld [vmem:[%s3 + $0x30] sm:$0xff]
  %v105 = vld [vmem:[%s3 + $0x38] sm:$0xff]
  %vm106 = vcmask 523264
  %v108 = vsel %vm106, %v97, 0
  %110 = vmatprep.subr.mxu0 0.0
  %111 = vmatpush1.msra.mxu0 %v98
  %112 = vmatprep.subr.mxu0 0.0
  %113 = vmatpush1.msra.mxu0 %v99
  %114 = vmatprep.subr.mxu0 0.0
  %115 = vmatpush1.msra.mxu0 %v100
  %116 = vmatprep.subr.mxu0 0.0
  %117 = vmatpush1.msra.mxu0 %v101
  %118 = vmatprep.subr.mxu0 0.0
  %119 = vmatpush1.msra.mxu0 %v102
  %120 = vmatprep.subr.mxu0 0.0
  %121 = vmatpush1.msra.mxu0 %v103
  %122 = vmatprep.subr.mxu0 0.0
  %123 = vmatpush1.msra.mxu0 %v104
  %124 = vmatprep.subr.mxu0 0.0
  %125 = vmatpush1.msra.mxu0 %v105
  %126 = vmatprep.subr.mxu0 0.0
  %127 = vmatpush1.msra.mxu0 0.0
  %128 = vmatprep.subr.mxu0 0.0
  %129 = vmatpush1.msra.mxu0 0.0
  %130 = vmatprep.subr.mxu0 0.0
  %131 = vmatpush1.msra.mxu0 0.0
  %132 = vmatprep.subr.mxu0 0.0
  %133 = vmatpush1.msra.mxu0 0.0
  %134 = vmatprep.subr.mxu0 0.0
  %135 = vmatpush1.msra.mxu0 0.0
  %136 = vmatprep.subr.mxu0 0.0
  %137 = vmatpush1.msra.mxu0 0.0
  %138 = vmatprep.subr.mxu0 0.0
  %139 = vmatpush1.msra.mxu0 0.0
  %140 = vmatprep.subr.mxu0 0.0
  %141 = vmatpush1.msra.mxu0 0.0
  %142 = vmatprep.subr.mxu0 0.0
  %143 = vmatpush1.msra.mxu0 0.0
  %144 = vmatprep.subr.mxu0 0.0
  %145 = vmatpush1.msra.mxu0 0.0
  %146 = vmatprep.subr.mxu0 0.0
  %147 = vmatpush1.msra.mxu0 0.0
  %148 = vmatprep.subr.mxu0 0.0
  %149 = vmatpush1.msra.mxu0 0.0
  %150 = vmatprep.subr.mxu0 0.0
  %151 = vmatpush1.msra.mxu0 0.0
  %152 = vmatprep.subr.mxu0 0.0
  %153 = vmatpush1.msra.mxu0 0.0
  %154 = vmatprep.subr.mxu0 0.0
  %155 = vmatpush1.msra.mxu0 0.0
  %156 = vmatprep.subr.mxu0 0.0
  %157 = vmatpush1.msra.mxu0 0.0
  %158 = vmatprep.subr.mxu0 0.0
  %159 = vmatpush1.msra.mxu0 0.0
  %160 = vmatprep.subr.mxu0 0.0
  %161 = vmatpush1.msra.mxu0 0.0
  %162 = vmatprep.subr.mxu0 0.0
  %163 = vmatpush1.msra.mxu0 0.0
  %164 = vmatprep.subr.mxu0 0.0
  %165 = vmatpush1.msra.mxu0 0.0
  %166 = vmatprep.subr.mxu0 0.0
  %167 = vmatpush1.msra.mxu0 0.0
  %168 = vmatprep.subr.mxu0 0.0
  %169 = vmatpush1.msra.mxu0 0.0
  %170 = vmatprep.subr.mxu0 0.0
  %171 = vmatpush1.msra.mxu0 0.0
  %172 = vmatprep.subr.mxu0 0.0
  %173 = vmatpush1.msra.mxu0 0.0
  %174 = vmatprep.mubr.f32.mxu0 0.0
  %175 = vmatmul.mubr.f32.gmra.mrb[0].mxu0 %v108
  %v176 = vpop.f32.mrb[0].mxu0
  %v177 = vadd.f32 0.0, %v176
  %v178 = vpop.f32.mrb[0].mxu0
  %179 = vdwg.mxu0
  %v180 = vld [vmem:[%s2] sm:$0xff]
  %v181 = vld [vmem:[%s2 + $0x8] sm:$0xff]
  %182 = vmatprep.subr.mxu0 0.0
  %183 = vmatpush1.msra.mxu0 %v180
  %184 = vmatprep.subr.mxu0 0.0
  %185 = vmatpush1.msra.mxu0 %v181
  %186 = vmatprep.subr.mxu0 0.0
  %187 = vmatpush1.msra.mxu0 0.0
  %188 = vmatprep.subr.mxu0 0.0
  %189 = vmatpush1.msra.mxu0 0.0
  %190 = vmatprep.subr.mxu0 0.0
  %191 = vmatpush1.msra.mxu0 0.0
  %192 = vmatprep.subr.mxu0 0.0
  %193 = vmatpush1.msra.mxu0 0.0
  %194 = vmatprep.subr.mxu0 0.0
  %195 = vmatpush1.msra.mxu0 0.0
  %196 = vmatprep.subr.mxu0 0.0
  %197 = vmatpush1.msra.mxu0 0.0
  %198 = vmatprep.subr.mxu0 0.0
  %199 = vmatpush1.msra.mxu0 0.0
  %200 = vmatprep.subr.mxu0 0.0
  %201 = vmatpush1.msra.mxu0 0.0
  %202 = vmatprep.subr.mxu0 0.0
  %203 = vmatpush1.msra.mxu0 0.0
  %204 = vmatprep.subr.mxu0 0.0
  %205 = vmatpush1.msra.mxu0 0.0
  %206 = vmatprep.subr.mxu0 0.0
  %207 = vmatpush1.msra.mxu0 0.0
  %208 = vmatprep.subr.mxu0 0.0
  %209 = vmatpush1.msra.mxu0 0.0
  %210 = vmatprep.subr.mxu0 0.0
  %211 = vmatpush1.msra.mxu0 0.0
  %212 = vmatprep.subr.mxu0 0.0
  %213 = vmatpush1.msra.mxu0 0.0
  %214 = vmatprep.subr.mxu0 0.0
  %215 = vmatpush1.msra.mxu0 0.0
  %216 = vmatprep.subr.mxu0 0.0
  %217 = vmatpush1.msra.mxu0 0.0
  %218 = vmatprep.subr.mxu0 0.0
  %219 = vmatpush1.msra.mxu0 0.0
  %220 = vmatprep.subr.mxu0 0.0
  %221 = vmatpush1.msra.mxu0 0.0
  %222 = vmatprep.subr.mxu0 0.0
  %223 = vmatpush1.msra.mxu0 0.0
  %224 = vmatprep.subr.mxu0 0.0
  %225 = vmatpush1.msra.mxu0 0.0
  %226 = vmatprep.subr.mxu0 0.0
  %227 = vmatpush1.msra.mxu0 0.0
  %228 = vmatprep.subr.mxu0 0.0
  %229 = vmatpush1.msra.mxu0 0.0
  %230 = vmatprep.subr.mxu0 0.0
  %231 = vmatpush1.msra.mxu0 0.0
  %232 = vmatprep.subr.mxu0 0.0
  %233 = vmatpush1.msra.mxu0 0.0
  %234 = vmatprep.subr.mxu0 0.0
  %235 = vmatpush1.msra.mxu0 0.0
  %236 = vmatprep.subr.mxu0 0.0
  %237 = vmatpush1.msra.mxu0 0.0
  %238 = vmatprep.subr.mxu0 0.0
  %239 = vmatpush1.msra.mxu0 0.0
  %240 = vmatprep.subr.mxu0 0.0
  %241 = vmatpush1.msra.mxu0 0.0
  %242 = vmatprep.subr.mxu0 0.0
  %243 = vmatpush1.msra.mxu0 0.0
  %244 = vmatprep.subr.mxu0 0.0
  %245 = vmatpush1.msra.mxu0 0.0
  %246 = vmatprep.mubr.f32.mxu0 0.0
  %247 = vmatmul.mubr.f32.gmra.mrb[0].mxu0 %v25
  %v248 = vpop.f32.mrb[0].mxu0
  %v249 = vadd.f32 0.0, %v248
  %v250 = vpop.f32.mrb[0].mxu0
  %251 = vdwg.mxu0
  %v252 = vmul.f32 %v177, -0.5
  %v253 = vadd.f32 %v252, %v249
  %v254 = vld [vmem:[%s4] sm:$0x1]
  %v256 = vlaneseq
  %v257 = vshrl.u32 %v256, 7
  %v258 = vsub.s32 0, %v257
  %v259 = vrot.slane %v254, %v258
  %v261 = vadd.f32 %v253, %v259
  %vm262 = vcmask 31744
  %263 = vst.msk [vmem:[%s5] sm:$0xff] %vm262, %v261
  // Predicated region
  $region22: #{tpu_custom_call.1} parent=0 // pred_check
    _
  $region23: #{tpu_custom_call.1} parent=0 // pred_check_branch
    %265 = sbr.rel (0) target = $region25
  $region24: #{tpu_custom_call.1} parent=0 // pred_region
    _
  $region25: #{tpu_custom_call.1} parent=0 // pred_fallthru
    _
  // Predicated region
  $region26: #{tpu_custom_call.1} parent=0 // pred_check
    _
  $region27: #{tpu_custom_call.1} parent=0 // pred_check_branch
    %267 = sbr.rel (0) target = $region29
  $region28: #{tpu_custom_call.1} parent=0 // pred_region
    _
  $region29: #{tpu_custom_call.1} parent=0 // pred_fallthru
    _

</llo_original>
